<compile_context>
chip_gen: v6e
topology: v6e:2x2x1
jax: 0.10.0
libtpu: 0.0.40
codegen_flags: <defaults>
</compile_context>

<pallas_src>
import math

import jax
import jax.numpy as jnp
from jax import lax
from jax.experimental import pallas as pl
from jax.experimental.pallas import tpu as pltpu  # noqa: F401  (not needed at this size)


def _lstm_kernel(ids_ref, emb_ref, wih_ref, whh_ref, b_ref, out_ref):
    """Whole embedding + LSTM forward in one grid-free invocation.

    ids_ref : (seq_len*bsz, 1) int32   time-major token ids
    emb_ref : (vocab_pad, emb_dim)     embedding table, vocab zero-padded to 128x
    wih_ref : (emb_dim, 4H)            W_ih^T, PyTorch gate order [i, f, g, o]
    whh_ref : (H, 4H)                  W_hh^T, same gate order
    b_ref   : (1, 4H)                  folded b_ih + b_hh
    out_ref : (bsz, seq_len*H)         lane-dense output (reshaped in wrapper)
    """
    H = whh_ref.shape[0]
    bsz = out_ref.shape[0]
    n_rows = ids_ref.shape[0]          # seq_len * bsz
    seq_len = n_rows // bsz
    vocab_pad = emb_ref.shape[0]

    # ---- Phase 0: fused embedding gather as a one-hot MXU matmul.
    # one-hot rows are exactly 0.0 / 1.0, so this is a row selection of the
    # f32 table through the precise multi-pass f32 MXU path.
    ids = ids_ref[...]                                               # (n_rows, 1)
    lane = lax.broadcasted_iota(jnp.int32, (n_rows, vocab_pad), 1)
    onehot = (lane == ids).astype(jnp.float32)                       # (n_rows, vocab_pad)
    x = jnp.dot(onehot, emb_ref[...], preferred_element_type=jnp.float32)   # (n_rows, emb)

    # ---- Phase 1: hoisted input projection (+bias), one MXU matmul, M=seq*bsz.
    gx = jnp.dot(x, wih_ref[...], preferred_element_type=jnp.float32) + b_ref[...]

    # ---- Phase 2: recurrence. seq_len is small & static -> fully unrolled so
    # all slices are static and only h @ W_hh^T sits on the serial chain.
    whh = whh_ref[...]                 # loop-invariant; RHS stays staged in the MXU
    h = jnp.zeros((bsz, H), jnp.float32)
    c = jnp.zeros((bsz, H), jnp.float32)
    for t in range(seq_len):
        gates = gx[t * bsz:(t + 1) * bsz, :] + jnp.dot(
            h, whh, preferred_element_type=jnp.float32)              # (bsz, 4H)
        # Apply both transcendentals to the full gates vreg, slice afterwards
        # (no relayout ahead of the EUP on the dependency chain). PyTorch gate
        # column order is [i, f, g, o].
        sig = jax.nn.sigmoid(gates)                                  # one EUP pass
        tnh = jnp.tanh(gates)                                        # one EUP pass
        i_g = sig[:, 0 * H:1 * H]
        f_g = sig[:, 1 * H:2 * H]
        g_g = tnh[:, 2 * H:3 * H]
        o_g = sig[:, 3 * H:4 * H]
        c = f_g * c + i_g * g_g
        h = o_g * jnp.tanh(c)
        # Per-step VMEM-resident slab store; HBM writeback is still a single
        # DMA of the full lane-dense (bsz, seq_len*H) block after the kernel.
        out_ref[:, t * H:(t + 1) * H] = h.astype(out_ref.dtype)


@jax.jit
def lstm_forward(token_ids, emb_pad, w_ih_t, w_hh_t, bias):
    """token_ids: (bsz, seq_len) int32 -> (bsz, seq_len, hidden_dim) float32."""
    bsz, seq_len = token_ids.shape
    vocab_pad, emb_dim = emb_pad.shape
    hidden_dim = w_hh_t.shape[0]
    n_rows = seq_len * bsz

    # Only the tiny int32 id matrix is rearranged (time-major rows); the
    # embedding gather itself happens inside the kernel.
    ids_col = token_ids.T.reshape(n_rows, 1).astype(jnp.int32)

    # Advisory cost hint so XLA schedules this microsecond-scale call well.
    flops = (2 * n_rows * vocab_pad * emb_dim            # one-hot gather matmul
             + 2 * n_rows * emb_dim * 4 * hidden_dim     # hoisted input projection
             + 2 * seq_len * bsz * hidden_dim * 4 * hidden_dim)  # recurrence
    transcendentals = seq_len * bsz * (2 * 4 * hidden_dim + hidden_dim)
    bytes_accessed = 4 * (n_rows * 1
                          + vocab_pad * emb_dim
                          + emb_dim * 4 * hidden_dim
                          + hidden_dim * 4 * hidden_dim
                          + 4 * hidden_dim
                          + bsz * seq_len * hidden_dim)

    out_flat = pl.pallas_call(
        _lstm_kernel,
        out_shape=jax.ShapeDtypeStruct((bsz, seq_len * hidden_dim), jnp.float32),
        in_specs=[
            pl.BlockSpec((n_rows, 1), lambda: (0, 0)),                     # token ids
            pl.BlockSpec((vocab_pad, emb_dim), lambda: (0, 0)),            # emb table
            pl.BlockSpec((emb_dim, 4 * hidden_dim), lambda: (0, 0)),       # W_ih^T
            pl.BlockSpec((hidden_dim, 4 * hidden_dim), lambda: (0, 0)),    # W_hh^T
            pl.BlockSpec((1, 4 * hidden_dim), lambda: (0, 0)),             # bias
        ],
        out_specs=pl.BlockSpec((bsz, seq_len * hidden_dim), lambda: (0, 0)),
        cost_estimate=pl.CostEstimate(flops=flops,
                                      transcendentals=transcendentals,
                                      bytes_accessed=bytes_accessed),
        # Total VMEM footprint is ~70 KiB — far under every generation's limit,
        # so no vmem_limit_bytes override is needed at this size.
    )(ids_col, emb_pad, w_ih_t, w_hh_t, bias)

    # Free contiguous reshape back to batch-first (bsz, seq_len, H).
    return out_flat.reshape(bsz, seq_len, hidden_dim)


def prepare_lstm_params(emb_table, w_ih, w_hh, b_ih, b_hh):
    """PyTorch nn.Embedding / nn.LSTM params -> kernel layout.

    - zero-pad the embedding vocab axis to a multiple of 128 (the in-kernel
      one-hot gather contracts over this axis on the MXU; padded rows are never
      selected since valid ids < n_words)
    - transpose LSTM weights to (in_features, 4H)
    - fold the two bias vectors into one (1, 4H) row
    PyTorch's [i, f, g, o] gate-column order is kept unchanged (the kernel
    slices gates after the full-vreg sigmoid/tanh, so no permutation is needed).
    """
    n_words, emb_dim = emb_table.shape
    H = w_hh.shape[1]
    vocab_pad = ((n_words + 127) // 128) * 128
    emb_pad = jnp.zeros((vocab_pad, emb_dim), jnp.float32).at[:n_words].set(emb_table)
    w_ih_t = jnp.transpose(w_ih)                       # (emb_dim, 4H)
    w_hh_t = jnp.transpose(w_hh)                       # (H, 4H)
    bias = (b_ih + b_hh).reshape(1, 4 * H)             # (1, 4H)
    return emb_pad, w_ih_t, w_hh_t, bias


def _reference_lstm(token_ids, emb_table, w_ih, w_hh, b_ih, b_hh):
    """Pure-JAX reference (lax.scan) in the original PyTorch [i,f,g,o] layout."""
    bsz, _ = token_ids.shape
    H = w_hh.shape[1]
    emb = jnp.take(emb_table, token_ids, axis=0)       # (bsz, seq, emb)
    x_tm = jnp.transpose(emb, (1, 0, 2))               # (seq, bsz, emb)

    def step(carry, x_t):
        h, c = carry
        gates = x_t @ w_ih.T + h @ w_hh.T + b_ih + b_hh
        i = jax.nn.sigmoid(gates[:, :H])
        f = jax.nn.sigmoid(gates[:, H:2 * H])
        g = jnp.tanh(gates[:, 2 * H:3 * H])
        o = jax.nn.sigmoid(gates[:, 3 * H:])
        c = f * c + i * g
        h = o * jnp.tanh(c)
        return (h, c), h

    h0 = jnp.zeros((bsz, H), jnp.float32)
    c0 = jnp.zeros((bsz, H), jnp.float32)
    _, hs = lax.scan(step, (h0, c0), x_tm)
    return jnp.transpose(hs, (1, 0, 2))                # (bsz, seq, H)


if __name__ == "__main__":
    # ---- synthetic config (mirrors module __init__ shapes) ----
    n_words, emb_dim, hidden_dim = 100, 32, 32
    bsz, seq_len = 2, 8

    key = jax.random.PRNGKey(0)
    k_emb, k_wih, k_whh, k_bih, k_bhh, k_x = jax.random.split(key, 6)

    # deterministic parameter init (PyTorch-style uniform(-1/sqrt(H), 1/sqrt(H)))
    bound = 1.0 / math.sqrt(hidden_dim)
    emb_table = jax.random.normal(k_emb, (n_words, emb_dim), jnp.float32)
    w_ih = jax.random.uniform(k_wih, (4 * hidden_dim, emb_dim), jnp.float32, -bound, bound)
    w_hh = jax.random.uniform(k_whh, (4 * hidden_dim, hidden_dim), jnp.float32, -bound, bound)
    b_ih = jax.random.uniform(k_bih, (4 * hidden_dim,), jnp.float32, -bound, bound)
    b_hh = jax.random.uniform(k_bhh, (4 * hidden_dim,), jnp.float32, -bound, bound)

    # wrapper-side param prep: pad vocab, transpose weights, fold biases
    emb_pad, w_ih_t, w_hh_t, bias = prepare_lstm_params(emb_table, w_ih, w_hh, b_ih, b_hh)

    # example input: token ids (bsz, seq_len)
    x = jax.random.randint(k_x, (bsz, seq_len), 0, n_words, jnp.int32)

    out = lstm_forward(x, emb_pad, w_ih_t, w_hh_t, bias)
    out = jax.block_until_ready(out)

    ref = _reference_lstm(x, emb_table, w_ih, w_hh, b_ih, b_hh)
    assert out.shape == (bsz, seq_len, hidden_dim)
    assert jnp.allclose(out, ref, atol=1e-5, rtol=1e-5), "mismatch vs JAX reference"

    print("KERNEL_OK")
</pallas_src>

<mosaic_0001>
module attributes {stable_mosaic.version = 11 : i64} {
  func.func @_lstm_kernel(%arg0: memref<16x1xi32, #tpu.memory_space<vmem>>, %arg1: memref<128x32xf32, #tpu.memory_space<vmem>>, %arg2: memref<32x128xf32, #tpu.memory_space<vmem>>, %arg3: memref<32x128xf32, #tpu.memory_space<vmem>>, %arg4: memref<1x128xf32, #tpu.memory_space<vmem>>, %arg5: memref<2x256xf32, #tpu.memory_space<vmem>>) attributes {dimension_semantics = [], scalar_prefetch = 0 : i64, scratch_operands = 0 : i64, tpu.core_type = #tpu.core_type<tc>} {
    %c0 = arith.constant 0 : index
    %c0_0 = arith.constant 0 : index
    %0 = vector.load %arg0[%c0, %c0_0] : memref<16x1xi32, #tpu.memory_space<vmem>>, vector<16x1xi32>
    %1 = tpu.iota {dimensions = array<i32: 1>} : vector<16x128xi32>
    %2 = vector.broadcast %0 : vector<16x1xi32> to vector<16x128xi32>
    %3 = arith.cmpi eq, %1, %2 : vector<16x128xi32>
    %4 = arith.extui %3 : vector<16x128xi1> to vector<16x128xi32>
    %5 = arith.sitofp %4 : vector<16x128xi32> to vector<16x128xf32>
    %c0_1 = arith.constant 0 : index
    %c0_2 = arith.constant 0 : index
    %6 = vector.load %arg1[%c0_1, %c0_2] : memref<128x32xf32, #tpu.memory_space<vmem>>, vector<128x32xf32>
    %cst = arith.constant dense<0.000000e+00> : vector<16x32xf32>
    %7 = tpu.matmul %5, %6, %cst {dimension_numbers = #tpu.dot_dimension_numbers<[1], [0], [0], [1], [0, 0, 1, 1], [], []>} : vector<16x128xf32>, vector<128x32xf32>, vector<16x32xf32> -> vector<16x32xf32>
    %c0_3 = arith.constant 0 : index
    %c0_4 = arith.constant 0 : index
    %8 = vector.load %arg2[%c0_3, %c0_4] : memref<32x128xf32, #tpu.memory_space<vmem>>, vector<32x128xf32>
    %cst_5 = arith.constant dense<0.000000e+00> : vector<16x128xf32>
    %9 = tpu.matmul %7, %8, %cst_5 {dimension_numbers = #tpu.dot_dimension_numbers<[1], [0], [0], [1], [0, 0, 1, 1], [], []>} : vector<16x32xf32>, vector<32x128xf32>, vector<16x128xf32> -> vector<16x128xf32>
    %c0_6 = arith.constant 0 : index
    %c0_7 = arith.constant 0 : index
    %10 = vector.load %arg4[%c0_6, %c0_7] : memref<1x128xf32, #tpu.memory_space<vmem>>, vector<1x128xf32>
    %11 = vector.broadcast %10 : vector<1x128xf32> to vector<16x128xf32>
    %12 = arith.addf %9, %11 : vector<16x128xf32>
    %c0_8 = arith.constant 0 : index
    %c0_9 = arith.constant 0 : index
    %13 = vector.load %arg3[%c0_8, %c0_9] : memref<32x128xf32, #tpu.memory_space<vmem>>, vector<32x128xf32>
    %cst_10 = arith.constant 0.000000e+00 : f32
    %14 = vector.broadcast %cst_10 : f32 to vector<2x32xf32>
    %cst_11 = arith.constant 0.000000e+00 : f32
    %15 = vector.broadcast %cst_11 : f32 to vector<2x32xf32>
    %16 = vector.extract_strided_slice %12 {offsets = [0, 0], sizes = [2, 128], strides = [1, 1]} : vector<16x128xf32> to vector<2x128xf32>
    %cst_12 = arith.constant dense<0.000000e+00> : vector<2x128xf32>
    %17 = tpu.matmul %14, %13, %cst_12 {dimension_numbers = #tpu.dot_dimension_numbers<[1], [0], [0], [1], [0, 0, 1, 1], [], []>} : vector<2x32xf32>, vector<32x128xf32>, vector<2x128xf32> -> vector<2x128xf32>
    %18 = arith.addf %16, %17 : vector<2x128xf32>
    %19 = arith.negf %18 : vector<2x128xf32>
    %20 = math.exp %19 : vector<2x128xf32>
    %cst_13 = arith.constant 1.000000e+00 : f32
    %21 = vector.broadcast %cst_13 : f32 to vector<2x128xf32>
    %22 = arith.addf %21, %20 : vector<2x128xf32>
    %23 = arith.divf %21, %22 : vector<2x128xf32>
    %24 = math.tanh %18 : vector<2x128xf32>
    %25 = vector.extract_strided_slice %23 {offsets = [0, 0], sizes = [2, 32], strides = [1, 1]} : vector<2x128xf32> to vector<2x32xf32>
    %26 = vector.extract_strided_slice %23 {offsets = [0, 32], sizes = [2, 32], strides = [1, 1]} : vector<2x128xf32> to vector<2x32xf32>
    %27 = vector.extract_strided_slice %24 {offsets = [0, 64], sizes = [2, 32], strides = [1, 1]} : vector<2x128xf32> to vector<2x32xf32>
    %28 = vector.extract_strided_slice %23 {offsets = [0, 96], sizes = [2, 32], strides = [1, 1]} : vector<2x128xf32> to vector<2x32xf32>
    %29 = arith.mulf %26, %15 : vector<2x32xf32>
    %30 = arith.mulf %25, %27 : vector<2x32xf32>
    %31 = arith.addf %29, %30 : vector<2x32xf32>
    %32 = math.tanh %31 : vector<2x32xf32>
    %33 = arith.mulf %28, %32 : vector<2x32xf32>
    %c0_14 = arith.constant 0 : index
    %c0_15 = arith.constant 0 : index
    %34 = vector.load %arg5[%c0_14, %c0_15] : memref<2x256xf32, #tpu.memory_space<vmem>>, vector<2x32xf32>
    tpu.vector_store %arg5[%c0_14, %c0_15], %33 {strides = array<i32>} : memref<2x256xf32, #tpu.memory_space<vmem>>, vector<2x32xf32>,
    %35 = vector.extract_strided_slice %12 {offsets = [2, 0], sizes = [2, 128], strides = [1, 1]} : vector<16x128xf32> to vector<2x128xf32>
    %cst_16 = arith.constant dense<0.000000e+00> : vector<2x128xf32>
    %36 = tpu.matmul %33, %13, %cst_16 {dimension_numbers = #tpu.dot_dimension_numbers<[1], [0], [0], [1], [0, 0, 1, 1], [], []>} : vector<2x32xf32>, vector<32x128xf32>, vector<2x128xf32> -> vector<2x128xf32>
    %37 = arith.addf %35, %36 : vector<2x128xf32>
    %38 = arith.negf %37 : vector<2x128xf32>
    %39 = math.exp %38 : vector<2x128xf32>
    %cst_17 = arith.constant 1.000000e+00 : f32
    %40 = vector.broadcast %cst_17 : f32 to vector<2x128xf32>
    %41 = arith.addf %40, %39 : vector<2x128xf32>
    %42 = arith.divf %40, %41 : vector<2x128xf32>
    %43 = math.tanh %37 : vector<2x128xf32>
    %44 = vector.extract_strided_slice %42 {offsets = [0, 0], sizes = [2, 32], strides = [1, 1]} : vector<2x128xf32> to vector<2x32xf32>
    %45 = vector.extract_strided_slice %42 {offsets = [0, 32], sizes = [2, 32], strides = [1, 1]} : vector<2x128xf32> to vector<2x32xf32>
    %46 = vector.extract_strided_slice %43 {offsets = [0, 64], sizes = [2, 32], strides = [1, 1]} : vector<2x128xf32> to vector<2x32xf32>
    %47 = vector.extract_strided_slice %42 {offsets = [0, 96], sizes = [2, 32], strides = [1, 1]} : vector<2x128xf32> to vector<2x32xf32>
    %48 = arith.mulf %45, %31 : vector<2x32xf32>
    %49 = arith.mulf %44, %46 : vector<2x32xf32>
    %50 = arith.addf %48, %49 : vector<2x32xf32>
    %51 = math.tanh %50 : vector<2x32xf32>
    %52 = arith.mulf %47, %51 : vector<2x32xf32>
    %c0_18 = arith.constant 0 : index
    %c32 = arith.constant 32 : index
    %53 = vector.load %arg5[%c0_18, %c32] : memref<2x256xf32, #tpu.memory_space<vmem>>, vector<2x32xf32>
    tpu.vector_store %arg5[%c0_18, %c32], %52 {strides = array<i32>} : memref<2x256xf32, #tpu.memory_space<vmem>>, vector<2x32xf32>,
    %54 = vector.extract_strided_slice %12 {offsets = [4, 0], sizes = [2, 128], strides = [1, 1]} : vector<16x128xf32> to vector<2x128xf32>
    %cst_19 = arith.constant dense<0.000000e+00> : vector<2x128xf32>
    %55 = tpu.matmul %52, %13, %cst_19 {dimension_numbers = #tpu.dot_dimension_numbers<[1], [0], [0], [1], [0, 0, 1, 1], [], []>} : vector<2x32xf32>, vector<32x128xf32>, vector<2x128xf32> -> vector<2x128xf32>
    %56 = arith.addf %54, %55 : vector<2x128xf32>
    %57 = arith.negf %56 : vector<2x128xf32>
    %58 = math.exp %57 : vector<2x128xf32>
    %cst_20 = arith.constant 1.000000e+00 : f32
    %59 = vector.broadcast %cst_20 : f32 to vector<2x128xf32>
    %60 = arith.addf %59, %58 : vector<2x128xf32>
    %61 = arith.divf %59, %60 : vector<2x128xf32>
    %62 = math.tanh %56 : vector<2x128xf32>
    %63 = vector.extract_strided_slice %61 {offsets = [0, 0], sizes = [2, 32], strides = [1, 1]} : vector<2x128xf32> to vector<2x32xf32>
    %64 = vector.extract_strided_slice %61 {offsets = [0, 32], sizes = [2, 32], strides = [1, 1]} : vector<2x128xf32> to vector<2x32xf32>
    %65 = vector.extract_strided_slice %62 {offsets = [0, 64], sizes = [2, 32], strides = [1, 1]} : vector<2x128xf32> to vector<2x32xf32>
    %66 = vector.extract_strided_slice %61 {offsets = [0, 96], sizes = [2, 32], strides = [1, 1]} : vector<2x128xf32> to vector<2x32xf32>
    %67 = arith.mulf %64, %50 : vector<2x32xf32>
    %68 = arith.mulf %63, %65 : vector<2x32xf32>
    %69 = arith.addf %67, %68 : vector<2x32xf32>
    %70 = math.tanh %69 : vector<2x32xf32>
    %71 = arith.mulf %66, %70 : vector<2x32xf32>
    %c0_21 = arith.constant 0 : index
    %c64 = arith.constant 64 : index
    %72 = vector.load %arg5[%c0_21, %c64] : memref<2x256xf32, #tpu.memory_space<vmem>>, vector<2x32xf32>
    tpu.vector_store %arg5[%c0_21, %c64], %71 {strides = array<i32>} : memref<2x256xf32, #tpu.memory_space<vmem>>, vector<2x32xf32>,
    %73 = vector.extract_strided_slice %12 {offsets = [6, 0], sizes = [2, 128], strides = [1, 1]} : vector<16x128xf32> to vector<2x128xf32>
    %cst_22 = arith.constant dense<0.000000e+00> : vector<2x128xf32>
    %74 = tpu.matmul %71, %13, %cst_22 {dimension_numbers = #tpu.dot_dimension_numbers<[1], [0], [0], [1], [0, 0, 1, 1], [], []>} : vector<2x32xf32>, vector<32x128xf32>, vector<2x128xf32> -> vector<2x128xf32>
    %75 = arith.addf %73, %74 : vector<2x128xf32>
    %76 = arith.negf %75 : vector<2x128xf32>
    %77 = math.exp %76 : vector<2x128xf32>
    %cst_23 = arith.constant 1.000000e+00 : f32
    %78 = vector.broadcast %cst_23 : f32 to vector<2x128xf32>
    %79 = arith.addf %78, %77 : vector<2x128xf32>
    %80 = arith.divf %78, %79 : vector<2x128xf32>
    %81 = math.tanh %75 : vector<2x128xf32>
    %82 = vector.extract_strided_slice %80 {offsets = [0, 0], sizes = [2, 32], strides = [1, 1]} : vector<2x128xf32> to vector<2x32xf32>
    %83 = vector.extract_strided_slice %80 {offsets = [0, 32], sizes = [2, 32], strides = [1, 1]} : vector<2x128xf32> to vector<2x32xf32>
    %84 = vector.extract_strided_slice %81 {offsets = [0, 64], sizes = [2, 32], strides = [1, 1]} : vector<2x128xf32> to vector<2x32xf32>
    %85 = vector.extract_strided_slice %80 {offsets = [0, 96], sizes = [2, 32], strides = [1, 1]} : vector<2x128xf32> to vector<2x32xf32>
    %86 = arith.mulf %83, %69 : vector<2x32xf32>
    %87 = arith.mulf %82, %84 : vector<2x32xf32>
    %88 = arith.addf %86, %87 : vector<2x32xf32>
    %89 = math.tanh %88 : vector<2x32xf32>
    %90 = arith.mulf %85, %89 : vector<2x32xf32>
    %c0_24 = arith.constant 0 : index
    %c96 = arith.constant 96 : index
    %91 = vector.load %arg5[%c0_24, %c96] : memref<2x256xf32, #tpu.memory_space<vmem>>, vector<2x32xf32>
    tpu.vector_store %arg5[%c0_24, %c96], %90 {strides = array<i32>} : memref<2x256xf32, #tpu.memory_space<vmem>>, vector<2x32xf32>,
    %92 = vector.extract_strided_slice %12 {offsets = [8, 0], sizes = [2, 128], strides = [1, 1]} : vector<16x128xf32> to vector<2x128xf32>
    %cst_25 = arith.constant dense<0.000000e+00> : vector<2x128xf32>
    %93 = tpu.matmul %90, %13, %cst_25 {dimension_numbers = #tpu.dot_dimension_numbers<[1], [0], [0], [1], [0, 0, 1, 1], [], []>} : vector<2x32xf32>, vector<32x128xf32>, vector<2x128xf32> -> vector<2x128xf32>
    %94 = arith.addf %92, %93 : vector<2x128xf32>
    %95 = arith.negf %94 : vector<2x128xf32>
    %96 = math.exp %95 : vector<2x128xf32>
    %cst_26 = arith.constant 1.000000e+00 : f32
    %97 = vector.broadcast %cst_26 : f32 to vector<2x128xf32>
    %98 = arith.addf %97, %96 : vector<2x128xf32>
    %99 = arith.divf %97, %98 : vector<2x128xf32>
    %100 = math.tanh %94 : vector<2x128xf32>
    %101 = vector.extract_strided_slice %99 {offsets = [0, 0], sizes = [2, 32], strides = [1, 1]} : vector<2x128xf32> to vector<2x32xf32>
    %102 = vector.extract_strided_slice %99 {offsets = [0, 32], sizes = [2, 32], strides = [1, 1]} : vector<2x128xf32> to vector<2x32xf32>
    %103 = vector.extract_strided_slice %100 {offsets = [0, 64], sizes = [2, 32], strides = [1, 1]} : vector<2x128xf32> to vector<2x32xf32>
    %104 = vector.extract_strided_slice %99 {offsets = [0, 96], sizes = [2, 32], strides = [1, 1]} : vector<2x128xf32> to vector<2x32xf32>
    %105 = arith.mulf %102, %88 : vector<2x32xf32>
    %106 = arith.mulf %101, %103 : vector<2x32xf32>
    %107 = arith.addf %105, %106 : vector<2x32xf32>
    %108 = math.tanh %107 : vector<2x32xf32>
    %109 = arith.mulf %104, %108 : vector<2x32xf32>
    %c0_27 = arith.constant 0 : index
    %c128 = arith.constant 128 : index
    %110 = vector.load %arg5[%c0_27, %c128] : memref<2x256xf32, #tpu.memory_space<vmem>>, vector<2x32xf32>
    tpu.vector_store %arg5[%c0_27, %c128], %109 {strides = array<i32>} : memref<2x256xf32, #tpu.memory_space<vmem>>, vector<2x32xf32>,
    %111 = vector.extract_strided_slice %12 {offsets = [10, 0], sizes = [2, 128], strides = [1, 1]} : vector<16x128xf32> to vector<2x128xf32>
    %cst_28 = arith.constant dense<0.000000e+00> : vector<2x128xf32>
    %112 = tpu.matmul %109, %13, %cst_28 {dimension_numbers = #tpu.dot_dimension_numbers<[1], [0], [0], [1], [0, 0, 1, 1], [], []>} : vector<2x32xf32>, vector<32x128xf32>, vector<2x128xf32> -> vector<2x128xf32>
    %113 = arith.addf %111, %112 : vector<2x128xf32>
    %114 = arith.negf %113 : vector<2x128xf32>
    %115 = math.exp %114 : vector<2x128xf32>
    %cst_29 = arith.constant 1.000000e+00 : f32
    %116 = vector.broadcast %cst_29 : f32 to vector<2x128xf32>
    %117 = arith.addf %116, %115 : vector<2x128xf32>
    %118 = arith.divf %116, %117 : vector<2x128xf32>
    %119 = math.tanh %113 : vector<2x128xf32>
    %120 = vector.extract_strided_slice %118 {offsets = [0, 0], sizes = [2, 32], strides = [1, 1]} : vector<2x128xf32> to vector<2x32xf32>
    %121 = vector.extract_strided_slice %118 {offsets = [0, 32], sizes = [2, 32], strides = [1, 1]} : vector<2x128xf32> to vector<2x32xf32>
    %122 = vector.extract_strided_slice %119 {offsets = [0, 64], sizes = [2, 32], strides = [1, 1]} : vector<2x128xf32> to vector<2x32xf32>
    %123 = vector.extract_strided_slice %118 {offsets = [0, 96], sizes = [2, 32], strides = [1, 1]} : vector<2x128xf32> to vector<2x32xf32>
    %124 = arith.mulf %121, %107 : vector<2x32xf32>
    %125 = arith.mulf %120, %122 : vector<2x32xf32>
    %126 = arith.addf %124, %125 : vector<2x32xf32>
    %127 = math.tanh %126 : vector<2x32xf32>
    %128 = arith.mulf %123, %127 : vector<2x32xf32>
    %c0_30 = arith.constant 0 : index
    %c160 = arith.constant 160 : index
    %129 = vector.load %arg5[%c0_30, %c160] : memref<2x256xf32, #tpu.memory_space<vmem>>, vector<2x32xf32>
    tpu.vector_store %arg5[%c0_30, %c160], %128 {strides = array<i32>} : memref<2x256xf32, #tpu.memory_space<vmem>>, vector<2x32xf32>,
    %130 = vector.extract_strided_slice %12 {offsets = [12, 0], sizes = [2, 128], strides = [1, 1]} : vector<16x128xf32> to vector<2x128xf32>
    %cst_31 = arith.constant dense<0.000000e+00> : vector<2x128xf32>
    %131 = tpu.matmul %128, %13, %cst_31 {dimension_numbers = #tpu.dot_dimension_numbers<[1], [0], [0], [1], [0, 0, 1, 1], [], []>} : vector<2x32xf32>, vector<32x128xf32>, vector<2x128xf32> -> vector<2x128xf32>
    %132 = arith.addf %130, %131 : vector<2x128xf32>
    %133 = arith.negf %132 : vector<2x128xf32>
    %134 = math.exp %133 : vector<2x128xf32>
    %cst_32 = arith.constant 1.000000e+00 : f32
    %135 = vector.broadcast %cst_32 : f32 to vector<2x128xf32>
    %136 = arith.addf %135, %134 : vector<2x128xf32>
    %137 = arith.divf %135, %136 : vector<2x128xf32>
    %138 = math.tanh %132 : vector<2x128xf32>
    %139 = vector.extract_strided_slice %137 {offsets = [0, 0], sizes = [2, 32], strides = [1, 1]} : vector<2x128xf32> to vector<2x32xf32>
    %140 = vector.extract_strided_slice %137 {offsets = [0, 32], sizes = [2, 32], strides = [1, 1]} : vector<2x128xf32> to vector<2x32xf32>
    %141 = vector.extract_strided_slice %138 {offsets = [0, 64], sizes = [2, 32], strides = [1, 1]} : vector<2x128xf32> to vector<2x32xf32>
    %142 = vector.extract_strided_slice %137 {offsets = [0, 96], sizes = [2, 32], strides = [1, 1]} : vector<2x128xf32> to vector<2x32xf32>
    %143 = arith.mulf %140, %126 : vector<2x32xf32>
    %144 = arith.mulf %139, %141 : vector<2x32xf32>
    %145 = arith.addf %143, %144 : vector<2x32xf32>
    %146 = math.tanh %145 : vector<2x32xf32>
    %147 = arith.mulf %142, %146 : vector<2x32xf32>
    %c0_33 = arith.constant 0 : index
    %c192 = arith.constant 192 : index
    %148 = vector.load %arg5[%c0_33, %c192] : memref<2x256xf32, #tpu.memory_space<vmem>>, vector<2x32xf32>
    tpu.vector_store %arg5[%c0_33, %c192], %147 {strides = array<i32>} : memref<2x256xf32, #tpu.memory_space<vmem>>, vector<2x32xf32>,
    %149 = vector.extract_strided_slice %12 {offsets = [14, 0], sizes = [2, 128], strides = [1, 1]} : vector<16x128xf32> to vector<2x128xf32>
    %cst_34 = arith.constant dense<0.000000e+00> : vector<2x128xf32>
    %150 = tpu.matmul %147, %13, %cst_34 {dimension_numbers = #tpu.dot_dimension_numbers<[1], [0], [0], [1], [0, 0, 1, 1], [], []>} : vector<2x32xf32>, vector<32x128xf32>, vector<2x128xf32> -> vector<2x128xf32>
    %151 = arith.addf %149, %150 : vector<2x128xf32>
    %152 = arith.negf %151 : vector<2x128xf32>
    %153 = math.exp %152 : vector<2x128xf32>
    %cst_35 = arith.constant 1.000000e+00 : f32
    %154 = vector.broadcast %cst_35 : f32 to vector<2x128xf32>
    %155 = arith.addf %154, %153 : vector<2x128xf32>
    %156 = arith.divf %154, %155 : vector<2x128xf32>
    %157 = math.tanh %151 : vector<2x128xf32>
    %158 = vector.extract_strided_slice %156 {offsets = [0, 0], sizes = [2, 32], strides = [1, 1]} : vector<2x128xf32> to vector<2x32xf32>
    %159 = vector.extract_strided_slice %156 {offsets = [0, 32], sizes = [2, 32], strides = [1, 1]} : vector<2x128xf32> to vector<2x32xf32>
    %160 = vector.extract_strided_slice %157 {offsets = [0, 64], sizes = [2, 32], strides = [1, 1]} : vector<2x128xf32> to vector<2x32xf32>
    %161 = vector.extract_strided_slice %156 {offsets = [0, 96], sizes = [2, 32], strides = [1, 1]} : vector<2x128xf32> to vector<2x32xf32>
    %162 = arith.mulf %159, %145 : vector<2x32xf32>
    %163 = arith.mulf %158, %160 : vector<2x32xf32>
    %164 = arith.addf %162, %163 : vector<2x32xf32>
    %165 = math.tanh %164 : vector<2x32xf32>
    %166 = arith.mulf %161, %165 : vector<2x32xf32>
    %c0_36 = arith.constant 0 : index
    %c224 = arith.constant 224 : index
    %167 = vector.load %arg5[%c0_36, %c224] : memref<2x256xf32, #tpu.memory_space<vmem>>, vector<2x32xf32>
    tpu.vector_store %arg5[%c0_36, %c224], %166 {strides = array<i32>} : memref<2x256xf32, #tpu.memory_space<vmem>>, vector<2x32xf32>,
    return
  }
}

</mosaic_0001>

<llo_original>
// kernel: lstm_forward.1
$region0: #{lstm_forward.1}
  #allocation0 [shape = 'u32[]', space=smem, size = 0x4, offset = 0x4, fixed_abs, tag = 'smem constant byte address 0x4 - core index']
  #allocation1 [shape = 'u32[144,128]{1,0:T(1,128)}', space=vmem, size = 0x12000, scoped, tag = 'internal scratch']
  %s0 = inlined_call_operand.vmem [shape: s32[16,1], index: 0, kind: input, shape index: {}]
  %s1 = inlined_call_operand.vmem [shape: f32[128,32], index: 1, kind: input, shape index: {}]
  %s2 = inlined_call_operand.vmem [shape: f32[32,128], index: 2, kind: input, shape index: {}]
  %s3 = inlined_call_operand.vmem [shape: f32[32,128], index: 3, kind: input, shape index: {}]
  %s4 = inlined_call_operand.vmem [shape: f32[1,128], index: 4, kind: input, shape index: {}]
  %s5 = inlined_call_operand.vmem [shape: f32[2,256], index: 5, kind: output, shape index: {}]
  %s6 = sld [smem:[#allocation0]]
  $region30: #{lstm_forward.1} parent=0
    _
  %s8 = ssub.s32 1, %s6
  %s9 = scalar_select 0, %s8, %s6
  // Predicated region
  $region2: #{lstm_forward.1} parent=0 // pred_check
    _
  $region3: #{lstm_forward.1} parent=0 // pred_check_branch
    %11 = sbr.rel (0) target = $region5
  $region4: #{lstm_forward.1} parent=0 // pred_region
    _
  $region5: #{lstm_forward.1} parent=0 // pred_fallthru
    _
  // Predicated region
  $region6: #{lstm_forward.1} parent=0 // pred_check
    _
  $region7: #{lstm_forward.1} parent=0 // pred_check_branch
    %13 = sbr.rel (0) target = $region9
  $region8: #{lstm_forward.1} parent=0 // pred_region
    _
  $region9: #{lstm_forward.1} parent=0 // pred_fallthru
    _
  // Predicated region
  $region10: #{lstm_forward.1} parent=0 // pred_check
    _
  $region11: #{lstm_forward.1} parent=0 // pred_check_branch
    %15 = sbr.rel (0) target = $region13
  $region12: #{lstm_forward.1} parent=0 // pred_region
    _
  $region13: #{lstm_forward.1} parent=0 // pred_fallthru
    _
  // Predicated region
  $region14: #{lstm_forward.1} parent=0 // pred_check
    _
  $region15: #{lstm_forward.1} parent=0 // pred_check_branch
    %17 = sbr.rel (0) target = $region17
  $region16: #{lstm_forward.1} parent=0 // pred_region
    _
  $region17: #{lstm_forward.1} parent=0 // pred_fallthru
    _
  // Predicated region
  $region18: #{lstm_forward.1} parent=0 // pred_check
    _
  $region19: #{lstm_forward.1} parent=0 // pred_check_branch
    %19 = sbr.rel (0) target = $region21
  $region20: #{lstm_forward.1} parent=0 // pred_region
    _
  $region21: #{lstm_forward.1} parent=0 // pred_fallthru
    _
  %v20 = vld [vmem:[%s0] sm:$0xff]
  %v21 = vld [vmem:[%s0 + $0x8] sm:$0xff]
  %v22 = vlaneseq
  %v23 = vand.u32 %v22, 127
  %24 = vset.pattern.permute.xlu0 0
  %25 = vperm.xlu0 %24, %v20
  %v26 = vpop.permute.xlu0 %25
  %27 = vset.pattern.permute.xlu0 0
  %28 = vperm.xlu0 %27, %v21
  %v29 = vpop.permute.xlu0 %28
  %vm30 = vcmp.eq.s32.totalorder %v23, %v26
  %vm31 = vcmp.eq.s32.totalorder %v23, %v29
  %v32 = vsel %vm30, 1, 0
  %v33 = vsel %vm31, 1, 0
  %v34 = vcvt.s32.f32 %v32
  %v35 = vcvt.s32.f32 %v33
  %v36 = vld [vmem:[%s1] sm:$0xff]
  %v37 = vld [vmem:[%s1 + $0x8] sm:$0xff]
  %v38 = vld [vmem:[%s1 + $0x10] sm:$0xff]
  %v39 = vld [vmem:[%s1 + $0x18] sm:$0xff]
  %v40 = vld [vmem:[%s1 + $0x20] sm:$0xff]
  %v41 = vld [vmem:[%s1 + $0x28] sm:$0xff]
  %v42 = vld [vmem:[%s1 + $0x30] sm:$0xff]
  %v43 = vld [vmem:[%s1 + $0x38] sm:$0xff]
  %v44 = vld [vmem:[%s1 + $0x40] sm:$0xff]
  %v45 = vld [vmem:[%s1 + $0x48] sm:$0xff]
  %v46 = vld [vmem:[%s1 + $0x50] sm:$0xff]
  %v47 = vld [vmem:[%s1 + $0x58] sm:$0xff]
  %v48 = vld [vmem:[%s1 + $0x60] sm:$0xff]
  %v49 = vld [vmem:[%s1 + $0x68] sm:$0xff]
  %v50 = vld [vmem:[%s1 + $0x70] sm:$0xff]
  %v51 = vld [vmem:[%s1 + $0x78] sm:$0xff]
  %52 = vmatprep.subr.mxu0 0.0
  %53 = vmatpush1.msra.mxu0 %v51
  %54 = vmatprep.subr.mxu0 0.0
  %55 = vmatpush1.msra.mxu0 %v50
  %56 = vmatprep.subr.mxu0 0.0
  %57 = vmatpush1.msra.mxu0 %v49
  %58 = vmatprep.subr.mxu0 0.0
  %59 = vmatpush1.msra.mxu0 %v48
  %60 = vmatprep.subr.mxu0 0.0
  %61 = vmatpush1.msra.mxu0 %v47
  %62 = vmatprep.subr.mxu0 0.0
  %63 = vmatpush1.msra.mxu0 %v46
  %64 = vmatprep.subr.mxu0 0.0
  %65 = vmatpush1.msra.mxu0 %v45
  %66 = vmatprep.subr.mxu0 0.0
  %67 = vmatpush1.msra.mxu0 %v44
  %68 = vmatprep.subr.mxu0 0.0
  %69 = vmatpush1.msra.mxu0 %v43
  %70 = vmatprep.subr.mxu0 0.0
  %71 = vmatpush1.msra.mxu0 %v42
  %72 = vmatprep.subr.mxu0 0.0
  %73 = vmatpush1.msra.mxu0 %v41
  %74 = vmatprep.subr.mxu0 0.0
  %75 = vmatpush1.msra.mxu0 %v40
  %76 = vmatprep.subr.mxu0 0.0
  %77 = vmatpush1.msra.mxu0 %v39
  %78 = vmatprep.subr.mxu0 0.0
  %79 = vmatpush1.msra.mxu0 %v38
  %80 = vmatprep.subr.mxu0 0.0
  %81 = vmatpush1.msra.mxu0 %v37
  %82 = vmatprep.subr.mxu0 0.0
  %83 = vmatpush1.msra.mxu0 %v36
  %84 = vmatprep.subr.mxu0 0.0
  %85 = vmatpush2.msra.mxu0 0.0
  %86 = vmatprep.subr.mxu0 0.0
  %87 = vmatpush2.msra.mxu0 0.0
  %88 = vmatprep.subr.mxu0 0.0
  %89 = vmatpush2.msra.mxu0 0.0
  %90 = vmatprep.subr.mxu0 0.0
  %91 = vmatpush2.msra.mxu0 0.0
  %92 = vmatprep.subr.mxu0 0.0
  %93 = vmatpush2.msra.mxu0 0.0
  %94 = vmatprep.subr.mxu0 0.0
  %95 = vmatpush2.msra.mxu0 0.0
  %96 = vmatprep.subr.mxu0 0.0
  %97 = vmatpush2.msra.mxu0 0.0
  %98 = vmatprep.subr.mxu0 0.0
  %99 = vmatpush2.msra.mxu0 0.0
  %100 = vmatprep.subr.mxu0 0.0
  %101 = vmatpush2.msra.mxu0 0.0
  %102 = vmatprep.subr.mxu0 0.0
  %103 = vmatpush2.msra.mxu0 0.0
  %104 = vmatprep.subr.mxu0 0.0
  %105 = vmatpush2.msra.mxu0 0.0
  %106 = vmatprep.subr.mxu0 0.0
  %107 = vmatpush2.msra.mxu0 0.0
  %108 = vmatprep.subr.mxu0 0.0
  %109 = vmatpush2.msra.mxu0 0.0
  %110 = vmatprep.subr.mxu0 0.0
  %111 = vmatpush2.msra.mxu0 0.0
  %112 = vmatprep.subr.mxu0 0.0
  %113 = vmatpush2.msra.mxu0 0.0
  %114 = vmatprep.subr.mxu0 0.0
  %115 = vmatpush2.msra.mxu0 0.0
  %116 = vmatprep.mubr.f32.mxu0 0.0
  %117 = vmatmul.mubr.f32.gmra.mxu0 %v34
  %v118 = vpop.f32.mrf.mxu0
  %v119 = vadd.f32 0.0, %v118
  %v120 = vpop.f32.mrf.mxu0
  %121 = vmatprep.mubr.f32.mxu0 0.0
  %122 = vmatmul.mubr.f32.gmra.mxu0 %v35
  %v123 = vpop.f32.mrf.mxu0
  %v124 = vadd.f32 0.0, %v123
  %v125 = vpop.f32.mrf.mxu0
  %126 = vdwg.mxu0
  %v127 = vld [vmem:[%s2] sm:$0xff]
  %v128 = vld [vmem:[%s2 + $0x8] sm:$0xff]
  %v129 = vld [vmem:[%s2 + $0x10] sm:$0xff]
  %v130 = vld [vmem:[%s2 + $0x18] sm:$0xff]
  %v131 = vld [vmem:[%s4] sm:$0x1]
  %v133 = vlaneseq
  %v134 = vshrl.u32 %v133, 7
  %v135 = vsub.s32 0, %v134
  %v136 = vrot.slane %v131, %v135
  %vm138 = vcmask 261120
  %v140 = vsel %vm138, %v119, 0
  %v143 = vsel %vm138, %v124, 0
  %145 = vmatprep.subr.mxu0 0.0
  %146 = vmatpush1.msra.mxu0 0.0
  %147 = vmatprep.subr.mxu0 0.0
  %148 = vmatpush1.msra.mxu0 0.0
  %149 = vmatprep.subr.mxu0 0.0
  %150 = vmatpush1.msra.mxu0 0.0
  %151 = vmatprep.subr.mxu0 0.0
  %152 = vmatpush1.msra.mxu0 0.0
  %153 = vmatprep.subr.mxu0 0.0
  %154 = vmatpush1.msra.mxu0 0.0
  %155 = vmatprep.subr.mxu0 0.0
  %156 = vmatpush1.msra.mxu0 0.0
  %157 = vmatprep.subr.mxu0 0.0
  %158 = vmatpush1.msra.mxu0 0.0
  %159 = vmatprep.subr.mxu0 0.0
  %160 = vmatpush1.msra.mxu0 0.0
  %161 = vmatprep.subr.mxu0 0.0
  %162 = vmatpush1.msra.mxu0 0.0
  %163 = vmatprep.subr.mxu0 0.0
  %164 = vmatpush1.msra.mxu0 0.0
  %165 = vmatprep.subr.mxu0 0.0
  %166 = vmatpush1.msra.mxu0 0.0
  %167 = vmatprep.subr.mxu0 0.0
  %168 = vmatpush1.msra.mxu0 0.0
  %169 = vmatprep.subr.mxu0 0.0
  %170 = vmatpush1.msra.mxu0 %v130
  %171 = vmatprep.subr.mxu0 0.0
  %172 = vmatpush1.msra.mxu0 %v129
  %173 = vmatprep.subr.mxu0 0.0
  %174 = vmatpush1.msra.mxu0 %v128
  %175 = vmatprep.subr.mxu0 0.0
  %176 = vmatpush1.msra.mxu0 %v127
  %177 = vmatprep.subr.mxu0 0.0
  %178 = vmatpush2.msra.mxu0 0.0
  %179 = vmatprep.subr.mxu0 0.0
  %180 = vmatpush2.msra.mxu0 0.0
  %181 = vmatprep.subr.mxu0 0.0
  %182 = vmatpush2.msra.mxu0 0.0
  %183 = vmatprep.subr.mxu0 0.0
  %184 = vmatpush2.msra.mxu0 0.0
  %185 = vmatprep.subr.mxu0 0.0
  %186 = vmatpush2.msra.mxu0 0.0
  %187 = vmatprep.subr.mxu0 0.0
  %188 = vmatpush2.msra.mxu0 0.0
  %189 = vmatprep.subr.mxu0 0.0
  %190 = vmatpush2.msra.mxu0 0.0
  %191 = vmatprep.subr.mxu0 0.0
  %192 = vmatpush2.msra.mxu0 0.0
  %193 = vmatprep.subr.mxu0 0.0
  %194 = vmatpush2.msra.mxu0 0.0
  %195 = vmatprep.subr.mxu0 0.0
  %196 = vmatpush2.msra.mxu0 0.0
  %197 = vmatprep.subr.mxu0 0.0
  %198 = vmatpush2.msra.mxu0 0.0
  %199 = vmatprep.subr.mxu0 0.0
  %200 = vmatpush2.msra.mxu0 0.0
  %201 = vmatprep.subr.mxu0 0.0
  %202 = vmatpush2.msra.mxu0 0.0
  %203 = vmatprep.subr.mxu0 0.0
  %204 = vmatpush2.msra.mxu0 0.0
  %205 = vmatprep.subr.mxu0 0.0
  %206 = vmatpush2.msra.mxu0 0.0
  %207 = vmatprep.subr.mxu0 0.0
  %208 = vmatpush2.msra.mxu0 0.0
  %209 = vmatprep.mubr.f32.mxu0 0.0
  %210 = vmatmul.mubr.f32.gmra.mxu0 %v140
  %v211 = vpop.f32.mrf.mxu0
  %v212 = vadd.f32 %v136, %v211
  %v213 = vpop.f32.mrf.mxu0
  %214 = vmatprep.mubr.f32.mxu0 0.0
  %215 = vmatmul.mubr.f32.gmra.mxu0 %v143
  %v216 = vpop.f32.mrf.mxu0
  %v217 = vadd.f32 %v136, %v216
  %v218 = vpop.f32.mrf.mxu0
  %219 = vdwg.mxu0
  %v220 = vld [vmem:[%s3] sm:$0xff]
  %v221 = vld [vmem:[%s3 + $0x8] sm:$0xff]
  %v222 = vld [vmem:[%s3 + $0x10] sm:$0xff]
  %v223 = vld [vmem:[%s3 + $0x18] sm:$0xff]
  %v225 = vsel %vm138, 0.0, 0
  %227 = vmatprep.subr.mxu0 0.0
  %228 = vmatpush1.msra.mxu0 0.0
  %229 = vmatprep.subr.mxu0 0.0
  %230 = vmatpush1.msra.mxu0 0.0
  %231 = vmatprep.subr.mxu0 0.0
  %232 = vmatpush1.msra.mxu0 0.0
  %233 = vmatprep.subr.mxu0 0.0
  %234 = vmatpush1.msra.mxu0 0.0
  %235 = vmatprep.subr.mxu0 0.0
  %236 = vmatpush1.msra.mxu0 0.0
  %237 = vmatprep.subr.mxu0 0.0
  %238 = vmatpush1.msra.mxu0 0.0
  %239 = vmatprep.subr.mxu0 0.0
  %240 = vmatpush1.msra.mxu0 0.0
  %241 = vmatprep.subr.mxu0 0.0
  %242 = vmatpush1.msra.mxu0 0.0
  %243 = vmatprep.subr.mxu0 0.0
  %244 = vmatpush1.msra.mxu0 0.0
  %245 = vmatprep.subr.mxu0 0.0
  %246 = vmatpush1.msra.mxu0 0.0
  %247 = vmatprep.subr.mxu0 0.0
  %248 = vmatpush1.msra.mxu0 0.0
  %249 = vmatprep.subr.mxu0 0.0
  %250 = vmatpush1.msra.mxu0 0.0
  %251 = vmatprep.subr.mxu0 0.0
  %252 = vmatpush1.msra.mxu0 %v223
  %253 = vmatprep.subr.mxu0 0.0
  %254 = vmatpush1.msra.mxu0 %v222
  %255 = vmatprep.subr.mxu0 0.0
  %256 = vmatpush1.msra.mxu0 %v221
  %257 = vmatprep.subr.mxu0 0.0
  %258 = vmatpush1.msra.mxu0 %v220
  %259 = vmatprep.subr.mxu0 0.0
  %260 = vmatpush2.msra.mxu0 0.0
  %261 = vmatprep.subr.mxu0 0.0
  %262 = vmatpush2.msra.mxu0 0.0
  %263 = vmatprep.subr.mxu0 0.0
  %264 = vmatpush2.msra.mxu0 0.0
  %265 = vmatprep.subr.mxu0 0.0
  %266 = vmatpush2.msra.mxu0 0.0
  %267 = vmatprep.subr.mxu0 0.0
  %268 = vmatpush2.msra.mxu0 0.0
  %269 = vmatprep.subr.mxu0 0.0
  %270 = vmatpush2.msra.mxu0 0.0
  %271 = vmatprep.subr.mxu0 0.0
  %272 = vmatpush2.msra.mxu0 0.0
  %273 = vmatprep.subr.mxu0 0.0
  %274 = vmatpush2.msra.mxu0 0.0
  %275 = vmatprep.subr.mxu0 0.0
  %276 = vmatpush2.msra.mxu0 0.0
  %277 = vmatprep.subr.mxu0 0.0
  %278 = vmatpush2.msra.mxu0 0.0
  %279 = vmatprep.subr.mxu0 0.0
  %280 = vmatpush2.msra.mxu0 0.0
  %281 = vmatprep.subr.mxu0 0.0
  %282 = vmatpush2.msra.mxu0 0.0
  %283 = vmatprep.subr.mxu0 0.0
  %284 = vmatpush2.msra.mxu0 0.0
  %285 = vmatprep.subr.mxu0 0.0
  %286 = vmatpush2.msra.mxu0 0.0
  %287 = vmatprep.subr.mxu0 0.0
  %288 = vmatpush2.msra.mxu0 0.0
  %289 = vmatprep.subr.mxu0 0.0
  %290 = vmatpush2.msra.mxu0 0.0
  %291 = vmatprep.mubr.f32.mxu0 0.0
  %292 = vmatmul.mubr.f32.gmra.mxu0 %v225
  %v293 = vpop.f32.mrf.mxu0
  %v294 = vadd.f32 0.0, %v293
  %v295 = vpop.f32.mrf.mxu0
  %296 = vdwg.mxu0
  %v297 = vadd.f32 %v212, %v294
  %v298 = vxor.u32 %v297, 2147483648
  %v299 = vmul.f32 %v298, 1.442695
  %v300 = vpow.pop %v299
  %v301 = vadd.f32 %v300, 1.0
  %v302 = vrcp.pop %v301
  %v303 = vmul.f32 1.0, %v302
  %v304 = vtanh.pop %v297
  %v305 = vmul.f32 %v303, 0.0
  %307 = vrot.lane.b32.xlu0 %v304, 64
  %v308 = vpop.permute.xlu0 %307
  %v310 = vmul.f32 %v303, %v308
  %312 = vrot.lane.b32.xlu0 %v310, 32
  %v313 = vpop.permute.xlu0 %312
  %v315 = vadd.f32 %v305, %v313
  %v316 = vtanh.pop %v315
  %318 = vrot.lane.b32.xlu0 %v316, 64
  %v319 = vpop.permute.xlu0 %318
  %v321 = vmul.f32 %v303, %v319
  %v324 = vunpack.c.l.s4 1983009808
  %v325 = vunpack.c.0.s8 %v324
  %v326 = vlaneseq
  %v327 = vshrl.u32 %v326, 7
  %v328 = vsub.s32 %v325, %v327
  %v329 = vrot.slane %v321, %v328
  %330 = vrot.lane.b32.xlu0 %v329, 32
  %v331 = vpop.permute.xlu0 %330
  %vm333 = vcmask 254976
  %334 = vst.msk [vmem:[%s5] sm:$0x3] %vm333, %v331
  %335 = vrot.lane.b32.xlu0 %v321, 32
  %v336 = vpop.permute.xlu0 %335
  %v337 = vsel %vm138, %v336, 0
  %339 = vmatprep.subr.mxu0 0.0
  %340 = vmatpush1.msra.mxu0 0.0
  %341 = vmatprep.subr.mxu0 0.0
  %342 = vmatpush1.msra.mxu0 0.0
  %343 = vmatprep.subr.mxu0 0.0
  %344 = vmatpush1.msra.mxu0 0.0
  %345 = vmatprep.subr.mxu0 0.0
  %346 = vmatpush1.msra.mxu0 0.0
  %347 = vmatprep.subr.mxu0 0.0
  %348 = vmatpush1.msra.mxu0 0.0
  %349 = vmatprep.subr.mxu0 0.0
  %350 = vmatpush1.msra.mxu0 0.0
  %351 = vmatprep.subr.mxu0 0.0
  %352 = vmatpush1.msra.mxu0 0.0
  %353 = vmatprep.subr.mxu0 0.0
  %354 = vmatpush1.msra.mxu0 0.0
  %355 = vmatprep.subr.mxu0 0.0
  %356 = vmatpush1.msra.mxu0 0.0
  %357 = vmatprep.subr.mxu0 0.0
  %358 = vmatpush1.msra.mxu0 0.0
  %359 = vmatprep.subr.mxu0 0.0
  %360 = vmatpush1.msra.mxu0 0.0
  %361 = vmatprep.subr.mxu0 0.0
  %362 = vmatpush1.msra.mxu0 0.0
  %363 = vmatprep.subr.mxu0 0.0
  %364 = vmatpush1.msra.mxu0 %v223
  %365 = vmatprep.subr.mxu0 0.0
  %366 = vmatpush1.msra.mxu0 %v222
  %367 = vmatprep.subr.mxu0 0.0
  %368 = vmatpush1.msra.mxu0 %v221
  %369 = vmatprep.subr.mxu0 0.0
  %370 = vmatpush1.msra.mxu0 %v220
  %371 = vmatprep.subr.mxu0 0.0
  %372 = vmatpush2.msra.mxu0 0.0
  %373 = vmatprep.subr.mxu0 0.0
  %374 = vmatpush2.msra.mxu0 0.0
  %375 = vmatprep.subr.mxu0 0.0
  %376 = vmatpush2.msra.mxu0 0.0
  %377 = vmatprep.subr.mxu0 0.0
  %378 = vmatpush2.msra.mxu0 0.0
  %379 = vmatprep.subr.mxu0 0.0
  %380 = vmatpush2.msra.mxu0 0.0
  %381 = vmatprep.subr.mxu0 0.0
  %382 = vmatpush2.msra.mxu0 0.0
  %383 = vmatprep.subr.mxu0 0.0
  %384 = vmatpush2.msra.mxu0 0.0
  %385 = vmatprep.subr.mxu0 0.0
  %386 = vmatpush2.msra.mxu0 0.0
  %387 = vmatprep.subr.mxu0 0.0
  %388 = vmatpush2.msra.mxu0 0.0
  %389 = vmatprep.subr.mxu0 0.0
  %390 = vmatpush2.msra.mxu0 0.0
  %391 = vmatprep.subr.mxu0 0.0
  %392 = vmatpush2.msra.mxu0 0.0
  %393 = vmatprep.subr.mxu0 0.0
  %394 = vmatpush2.msra.mxu0 0.0
  %395 = vmatprep.subr.mxu0 0.0
  %396 = vmatpush2.msra.mxu0 0.0
  %397 = vmatprep.subr.mxu0 0.0
  %398 = vmatpush2.msra.mxu0 0.0
  %399 = vmatprep.subr.mxu0 0.0
  %400 = vmatpush2.msra.mxu0 0.0
  %401 = vmatprep.subr.mxu0 0.0
  %402 = vmatpush2.msra.mxu0 0.0
  %403 = vmatprep.mubr.f32.mxu0 0.0
  %404 = vmatmul.mubr.f32.gmra.mxu0 %v337
  %v405 = vpop.f32.mrf.mxu0
  %v406 = vadd.f32 0.0, %v405
  %v407 = vpop.f32.mrf.mxu0
  %408 = vdwg.mxu0
  %v410 = vrot.slane %v406, 6
  %v412 = vadd.f32 %v212, %v410
  %v413 = vxor.u32 %v412, 2147483648
  %v414 = vmul.f32 %v413, 1.442695
  %v415 = vpow.pop %v414
  %v416 = vadd.f32 %v415, 1.0
  %v417 = vrcp.pop %v416
  %v418 = vmul.f32 1.0, %v417
  %v419 = vtanh.pop %v412
  %v421 = vrot.slane %v315, 6
  %v423 = vmul.f32 %v418, %v421
  %425 = vrot.lane.b32.xlu0 %v419, 64
  %v426 = vpop.permute.xlu0 %425
  %v428 = vmul.f32 %v418, %v426
  %430 = vrot.lane.b32.xlu0 %v428, 32
  %v431 = vpop.permute.xlu0 %430
  %v433 = vadd.f32 %v423, %v431
  %v434 = vtanh.pop %v433
  %436 = vrot.lane.b32.xlu0 %v434, 64
  %v437 = vpop.permute.xlu0 %436
  %v439 = vmul.f32 %v418, %v437
  %v442 = vunpack.c.l.s4 1983009808
  %v443 = vunpack.c.0.s8 %v442
  %v444 = vlaneseq
  %v445 = vshrl.u32 %v444, 7
  %v446 = vsub.s32 %v443, %v445
  %v447 = vrot.slane %v439, %v446
  %v448 = vcombine.high %v447, %v447
  %449 = vrot.lane.b32.xlu0 %v448, 64
  %v450 = vpop.permute.xlu0 %449
  %vm452 = vcmask 517376
  %453 = vst.msk [vmem:[%s5] sm:$0x3] %vm452, %v450
  %v454 = vrot.slane %v439, 2
  %455 = vrot.lane.b32.xlu0 %v454, 32
  %v456 = vpop.permute.xlu0 %455
  %v457 = vsel %vm138, %v456, 0
  %459 = vmatprep.subr.mxu0 0.0
  %460 = vmatpush1.msra.mxu0 0.0
  %461 = vmatprep.subr.mxu0 0.0
  %462 = vmatpush1.msra.mxu0 0.0
  %463 = vmatprep.subr.mxu0 0.0
  %464 = vmatpush1.msra.mxu0 0.0
  %465 = vmatprep.subr.mxu0 0.0
  %466 = vmatpush1.msra.mxu0 0.0
  %467 = vmatprep.subr.mxu0 0.0
  %468 = vmatpush1.msra.mxu0 0.0
  %469 = vmatprep.subr.mxu0 0.0
  %470 = vmatpush1.msra.mxu0 0.0
  %471 = vmatprep.subr.mxu0 0.0
  %472 = vmatpush1.msra.mxu0 0.0
  %473 = vmatprep.subr.mxu0 0.0
  %474 = vmatpush1.msra.mxu0 0.0
  %475 = vmatprep.subr.mxu0 0.0
  %476 = vmatpush1.msra.mxu0 0.0
  %477 = vmatprep.subr.mxu0 0.0
  %478 = vmatpush1.msra.mxu0 0.0
  %479 = vmatprep.subr.mxu0 0.0
  %480 = vmatpush1.msra.mxu0 0.0
  %481 = vmatprep.subr.mxu0 0.0
  %482 = vmatpush1.msra.mxu0 0.0
  %483 = vmatprep.subr.mxu0 0.0
  %484 = vmatpush1.msra.mxu0 %v223
  %485 = vmatprep.subr.mxu0 0.0
  %486 = vmatpush1.msra.mxu0 %v222
  %487 = vmatprep.subr.mxu0 0.0
  %488 = vmatpush1.msra.mxu0 %v221
  %489 = vmatprep.subr.mxu0 0.0
  %490 = vmatpush1.msra.mxu0 %v220
  %491 = vmatprep.subr.mxu0 0.0
  %492 = vmatpush2.msra.mxu0 0.0
  %493 = vmatprep.subr.mxu0 0.0
  %494 = vmatpush2.msra.mxu0 0.0
  %495 = vmatprep.subr.mxu0 0.0
  %496 = vmatpush2.msra.mxu0 0.0
  %497 = vmatprep.subr.mxu0 0.0
  %498 = vmatpush2.msra.mxu0 0.0
  %499 = vmatprep.subr.mxu0 0.0
  %500 = vmatpush2.msra.mxu0 0.0
  %501 = vmatprep.subr.mxu0 0.0
  %502 = vmatpush2.msra.mxu0 0.0
  %503 = vmatprep.subr.mxu0 0.0
  %504 = vmatpush2.msra.mxu0 0.0
  %505 = vmatprep.subr.mxu0 0.0
  %506 = vmatpush2.msra.mxu0 0.0
  %507 = vmatprep.subr.mxu0 0.0
  %508 = vmatpush2.msra.mxu0 0.0
  %509 = vmatprep.subr.mxu0 0.0
  %510 = vmatpush2.msra.mxu0 0.0
  %511 = vmatprep.subr.mxu0 0.0
  %512 = vmatpush2.msra.mxu0 0.0
  %513 = vmatprep.subr.mxu0 0.0
  %514 = vmatpush2.msra.mxu0 0.0
  %515 = vmatprep.subr.mxu0 0.0
  %516 = vmatpush2.msra.mxu0 0.0
  %517 = vmatprep.subr.mxu0 0.0
  %518 = vmatpush2.msra.mxu0 0.0
  %519 = vmatprep.subr.mxu0 0.0
  %520 = vmatpush2.msra.mxu0 0.0
  %521 = vmatprep.subr.mxu0 0.0
  %522 = vmatpush2.msra.mxu0 0.0
  %523 = vmatprep.mubr.f32.mxu0 0.0
  %524 = vmatmul.mubr.f32.gmra.mxu0 %v457
  %v525 = vpop.f32.mrf.mxu0
  %v526 = vadd.f32 0.0, %v525
  %v527 = vpop.f32.mrf.mxu0
  %528 = vdwg.mxu0
  %v530 = vrot.slane %v526, 4
  %v532 = vadd.f32 %v212, %v530
  %v533 = vxor.u32 %v532, 2147483648
  %v534 = vmul.f32 %v533, 1.442695
  %v535 = vpow.pop %v534
  %v536 = vadd.f32 %v535, 1.0
  %v537 = vrcp.pop %v536
  %v538 = vmul.f32 1.0, %v537
  %v539 = vtanh.pop %v532
  %v541 = vrot.slane %v433, 6
  %v543 = vmul.f32 %v538, %v541
  %545 = vrot.lane.b32.xlu0 %v539, 64
  %v546 = vpop.permute.xlu0 %545
  %v548 = vmul.f32 %v538, %v546
  %550 = vrot.lane.b32.xlu0 %v548, 32
  %v551 = vpop.permute.xlu0 %550
  %v553 = vadd.f32 %v543, %v551
  %v554 = vtanh.pop %v553
  %556 = vrot.lane.b32.xlu0 %v554, 64
  %v557 = vpop.permute.xlu0 %556
  %v559 = vmul.f32 %v538, %v557
  %v561 = vcombine.high %v559, %v559
  %v563 = vunpack.c.l.s4 1983009808
  %v564 = vunpack.c.0.s8 %v563
  %v565 = vlaneseq
  %v566 = vshrl.u32 %v565, 7
  %v567 = vsub.s32 %v564, %v566
  %v568 = vrot.slane %v561, %v567
  %569 = vrot.lane.b32.xlu0 %v568, 96
  %v570 = vpop.permute.xlu0 %569
  %vm572 = vcmask 779776
  %573 = vst.msk [vmem:[%s5] sm:$0x3] %vm572, %v570
  %v574 = vrot.slane %v559, 4
  %575 = vrot.lane.b32.xlu0 %v574, 32
  %v576 = vpop.permute.xlu0 %575
  %v577 = vsel %vm138, %v576, 0
  %579 = vmatprep.subr.mxu0 0.0
  %580 = vmatpush1.msra.mxu0 0.0
  %581 = vmatprep.subr.mxu0 0.0
  %582 = vmatpush1.msra.mxu0 0.0
  %583 = vmatprep.subr.mxu0 0.0
  %584 = vmatpush1.msra.mxu0 0.0
  %585 = vmatprep.subr.mxu0 0.0
  %586 = vmatpush1.msra.mxu0 0.0
  %587 = vmatprep.subr.mxu0 0.0
  %588 = vmatpush1.msra.mxu0 0.0
  %589 = vmatprep.subr.mxu0 0.0
  %590 = vmatpush1.msra.mxu0 0.0
  %591 = vmatprep.subr.mxu0 0.0
  %592 = vmatpush1.msra.mxu0 0.0
  %593 = vmatprep.subr.mxu0 0.0
  %594 = vmatpush1.msra.mxu0 0.0
  %595 = vmatprep.subr.mxu0 0.0
  %596 = vmatpush1.msra.mxu0 0.0
  %597 = vmatprep.subr.mxu0 0.0
  %598 = vmatpush1.msra.mxu0 0.0
  %599 = vmatprep.subr.mxu0 0.0
  %600 = vmatpush1.msra.mxu0 0.0
  %601 = vmatprep.subr.mxu0 0.0
  %602 = vmatpush1.msra.mxu0 0.0
  %603 = vmatprep.subr.mxu0 0.0
  %604 = vmatpush1.msra.mxu0 %v223
  %605 = vmatprep.subr.mxu0 0.0
  %606 = vmatpush1.msra.mxu0 %v222
  %607 = vmatprep.subr.mxu0 0.0
  %608 = vmatpush1.msra.mxu0 %v221
  %609 = vmatprep.subr.mxu0 0.0
  %610 = vmatpush1.msra.mxu0 %v220
  %611 = vmatprep.subr.mxu0 0.0
  %612 = vmatpush2.msra.mxu0 0.0
  %613 = vmatprep.subr.mxu0 0.0
  %614 = vmatpush2.msra.mxu0 0.0
  %615 = vmatprep.subr.mxu0 0.0
  %616 = vmatpush2.msra.mxu0 0.0
  %617 = vmatprep.subr.mxu0 0.0
  %618 = vmatpush2.msra.mxu0 0.0
  %619 = vmatprep.subr.mxu0 0.0
  %620 = vmatpush2.msra.mxu0 0.0
  %621 = vmatprep.subr.mxu0 0.0
  %622 = vmatpush2.msra.mxu0 0.0
  %623 = vmatprep.subr.mxu0 0.0
  %624 = vmatpush2.msra.mxu0 0.0
  %625 = vmatprep.subr.mxu0 0.0
  %626 = vmatpush2.msra.mxu0 0.0
  %627 = vmatprep.subr.mxu0 0.0
  %628 = vmatpush2.msra.mxu0 0.0
  %629 = vmatprep.subr.mxu0 0.0
  %630 = vmatpush2.msra.mxu0 0.0
  %631 = vmatprep.subr.mxu0 0.0
  %632 = vmatpush2.msra.mxu0 0.0
  %633 = vmatprep.subr.mxu0 0.0
  %634 = vmatpush2.msra.mxu0 0.0
  %635 = vmatprep.subr.mxu0 0.0
  %636 = vmatpush2.msra.mxu0 0.0
  %637 = vmatprep.subr.mxu0 0.0
  %638 = vmatpush2.msra.mxu0 0.0
  %639 = vmatprep.subr.mxu0 0.0
  %640 = vmatpush2.msra.mxu0 0.0
  %641 = vmatprep.subr.mxu0 0.0
  %642 = vmatpush2.msra.mxu0 0.0
  %643 = vmatprep.mubr.f32.mxu0 0.0
  %644 = vmatmul.mubr.f32.gmra.mxu0 %v577
  %v645 = vpop.f32.mrf.mxu0
  %v646 = vadd.f32 0.0, %v645
  %v647 = vpop.f32.mrf.mxu0
  %648 = vdwg.mxu0
  %v650 = vrot.slane %v646, 2
  %v652 = vadd.f32 %v212, %v650
  %v653 = vxor.u32 %v652, 2147483648
  %v654 = vmul.f32 %v653, 1.442695
  %v655 = vpow.pop %v654
  %v656 = vadd.f32 %v655, 1.0
  %v657 = vrcp.pop %v656
  %v658 = vmul.f32 1.0, %v657
  %v659 = vtanh.pop %v652
  %v661 = vrot.slane %v553, 6
  %v663 = vmul.f32 %v658, %v661
  %665 = vrot.lane.b32.xlu0 %v659, 64
  %v666 = vpop.permute.xlu0 %665
  %v668 = vmul.f32 %v658, %v666
  %670 = vrot.lane.b32.xlu0 %v668, 32
  %v671 = vpop.permute.xlu0 %670
  %v673 = vadd.f32 %v663, %v671
  %v674 = vtanh.pop %v673
  %676 = vrot.lane.b32.xlu0 %v674, 64
  %v677 = vpop.permute.xlu0 %676
  %v679 = vmul.f32 %v658, %v677
  %v681 = vcombine.high %v679, %v679
  %v683 = vunpack.c.l.s4 1983009808
  %v684 = vunpack.c.0.s8 %v683
  %v685 = vlaneseq
  %v686 = vshrl.u32 %v685, 7
  %v687 = vsub.s32 %v684, %v686
  %v688 = vrot.slane %v681, %v687
  %v689 = vcombine.high %v688, %v688
  %vm691 = vcmask 1042176
  %692 = vst.msk [vmem:[%s5] sm:$0x3] %vm691, %v689
  %v693 = vrot.slane %v679, 6
  %694 = vrot.lane.b32.xlu0 %v693, 32
  %v695 = vpop.permute.xlu0 %694
  %v696 = vsel %vm138, %v695, 0
  %698 = vmatprep.subr.mxu0 0.0
  %699 = vmatpush1.msra.mxu0 0.0
  %700 = vmatprep.subr.mxu0 0.0
  %701 = vmatpush1.msra.mxu0 0.0
  %702 = vmatprep.subr.mxu0 0.0
  %703 = vmatpush1.msra.mxu0 0.0
  %704 = vmatprep.subr.mxu0 0.0
  %705 = vmatpush1.msra.mxu0 0.0
  %706 = vmatprep.subr.mxu0 0.0
  %707 = vmatpush1.msra.mxu0 0.0
  %708 = vmatprep.subr.mxu0 0.0
  %709 = vmatpush1.msra.mxu0 0.0
  %710 = vmatprep.subr.mxu0 0.0
  %711 = vmatpush1.msra.mxu0 0.0
  %712 = vmatprep.subr.mxu0 0.0
  %713 = vmatpush1.msra.mxu0 0.0
  %714 = vmatprep.subr.mxu0 0.0
  %715 = vmatpush1.msra.mxu0 0.0
  %716 = vmatprep.subr.mxu0 0.0
  %717 = vmatpush1.msra.mxu0 0.0
  %718 = vmatprep.subr.mxu0 0.0
  %719 = vmatpush1.msra.mxu0 0.0
  %720 = vmatprep.subr.mxu0 0.0
  %721 = vmatpush1.msra.mxu0 0.0
  %722 = vmatprep.subr.mxu0 0.0
  %723 = vmatpush1.msra.mxu0 %v223
  %724 = vmatprep.subr.mxu0 0.0
  %725 = vmatpush1.msra.mxu0 %v222
  %726 = vmatprep.subr.mxu0 0.0
  %727 = vmatpush1.msra.mxu0 %v221
  %728 = vmatprep.subr.mxu0 0.0
  %729 = vmatpush1.msra.mxu0 %v220
  %730 = vmatprep.subr.mxu0 0.0
  %731 = vmatpush2.msra.mxu0 0.0
  %732 = vmatprep.subr.mxu0 0.0
  %733 = vmatpush2.msra.mxu0 0.0
  %734 = vmatprep.subr.mxu0 0.0
  %735 = vmatpush2.msra.mxu0 0.0
  %736 = vmatprep.subr.mxu0 0.0
  %737 = vmatpush2.msra.mxu0 0.0
  %738 = vmatprep.subr.mxu0 0.0
  %739 = vmatpush2.msra.mxu0 0.0
  %740 = vmatprep.subr.mxu0 0.0
  %741 = vmatpush2.msra.mxu0 0.0
  %742 = vmatprep.subr.mxu0 0.0
  %743 = vmatpush2.msra.mxu0 0.0
  %744 = vmatprep.subr.mxu0 0.0
  %745 = vmatpush2.msra.mxu0 0.0
  %746 = vmatprep.subr.mxu0 0.0
  %747 = vmatpush2.msra.mxu0 0.0
  %748 = vmatprep.subr.mxu0 0.0
  %749 = vmatpush2.msra.mxu0 0.0
  %750 = vmatprep.subr.mxu0 0.0
  %751 = vmatpush2.msra.mxu0 0.0
  %752 = vmatprep.subr.mxu0 0.0
  %753 = vmatpush2.msra.mxu0 0.0
  %754 = vmatprep.subr.mxu0 0.0
  %755 = vmatpush2.msra.mxu0 0.0
  %756 = vmatprep.subr.mxu0 0.0
  %757 = vmatpush2.msra.mxu0 0.0
  %758 = vmatprep.subr.mxu0 0.0
  %759 = vmatpush2.msra.mxu0 0.0
  %760 = vmatprep.subr.mxu0 0.0
  %761 = vmatpush2.msra.mxu0 0.0
  %762 = vmatprep.mubr.f32.mxu0 0.0
  %763 = vmatmul.mubr.f32.gmra.mxu0 %v696
  %v764 = vpop.f32.mrf.mxu0
  %v765 = vadd.f32 0.0, %v764
  %v766 = vpop.f32.mrf.mxu0
  %767 = vdwg.mxu0
  %v768 = vadd.f32 %v217, %v765
  %v769 = vxor.u32 %v768, 2147483648
  %v770 = vmul.f32 %v769, 1.442695
  %v771 = vpow.pop %v770
  %v772 = vadd.f32 %v771, 1.0
  %v773 = vrcp.pop %v772
  %v774 = vmul.f32 1.0, %v773
  %v775 = vtanh.pop %v768
  %v777 = vrot.slane %v673, 6
  %v779 = vmul.f32 %v774, %v777
  %781 = vrot.lane.b32.xlu0 %v775, 64
  %v782 = vpop.permute.xlu0 %781
  %v784 = vmul.f32 %v774, %v782
  %786 = vrot.lane.b32.xlu0 %v784, 32
  %v787 = vpop.permute.xlu0 %786
  %v789 = vadd.f32 %v779, %v787
  %v790 = vtanh.pop %v789
  %792 = vrot.lane.b32.xlu0 %v790, 64
  %v793 = vpop.permute.xlu0 %792
  %v795 = vmul.f32 %v774, %v793
  %v798 = vunpack.c.l.s4 1983009808
  %v799 = vunpack.c.0.s8 %v798
  %v800 = vlaneseq
  %v801 = vshrl.u32 %v800, 7
  %v802 = vsub.s32 %v799, %v801
  %v803 = vrot.slane %v795, %v802
  %804 = vrot.lane.b32.xlu0 %v803, 32
  %v805 = vpop.permute.xlu0 %804
  %807 = vst.msk [vmem:[%s5 + $0x2] sm:$0x3] %vm333, %v805
  %808 = vrot.lane.b32.xlu0 %v795, 32
  %v809 = vpop.permute.xlu0 %808
  %v810 = vsel %vm138, %v809, 0
  %812 = vmatprep.subr.mxu0 0.0
  %813 = vmatpush1.msra.mxu0 0.0
  %814 = vmatprep.subr.mxu0 0.0
  %815 = vmatpush1.msra.mxu0 0.0
  %816 = vmatprep.subr.mxu0 0.0
  %817 = vmatpush1.msra.mxu0 0.0
  %818 = vmatprep.subr.mxu0 0.0
  %819 = vmatpush1.msra.mxu0 0.0
  %820 = vmatprep.subr.mxu0 0.0
  %821 = vmatpush1.msra.mxu0 0.0
  %822 = vmatprep.subr.mxu0 0.0
  %823 = vmatpush1.msra.mxu0 0.0
  %824 = vmatprep.subr.mxu0 0.0
  %825 = vmatpush1.msra.mxu0 0.0
  %826 = vmatprep.subr.mxu0 0.0
  %827 = vmatpush1.msra.mxu0 0.0
  %828 = vmatprep.subr.mxu0 0.0
  %829 = vmatpush1.msra.mxu0 0.0
  %830 = vmatprep.subr.mxu0 0.0
  %831 = vmatpush1.msra.mxu0 0.0
  %832 = vmatprep.subr.mxu0 0.0
  %833 = vmatpush1.msra.mxu0 0.0
  %834 = vmatprep.subr.mxu0 0.0
  %835 = vmatpush1.msra.mxu0 0.0
  %836 = vmatprep.subr.mxu0 0.0
  %837 = vmatpush1.msra.mxu0 %v223
  %838 = vmatprep.subr.mxu0 0.0
  %839 = vmatpush1.msra.mxu0 %v222
  %840 = vmatprep.subr.mxu0 0.0
  %841 = vmatpush1.msra.mxu0 %v221
  %842 = vmatprep.subr.mxu0 0.0
  %843 = vmatpush1.msra.mxu0 %v220
  %844 = vmatprep.subr.mxu0 0.0
  %845 = vmatpush2.msra.mxu0 0.0
  %846 = vmatprep.subr.mxu0 0.0
  %847 = vmatpush2.msra.mxu0 0.0
  %848 = vmatprep.subr.mxu0 0.0
  %849 = vmatpush2.msra.mxu0 0.0
  %850 = vmatprep.subr.mxu0 0.0
  %851 = vmatpush2.msra.mxu0 0.0
  %852 = vmatprep.subr.mxu0 0.0
  %853 = vmatpush2.msra.mxu0 0.0
  %854 = vmatprep.subr.mxu0 0.0
  %855 = vmatpush2.msra.mxu0 0.0
  %856 = vmatprep.subr.mxu0 0.0
  %857 = vmatpush2.msra.mxu0 0.0
  %858 = vmatprep.subr.mxu0 0.0
  %859 = vmatpush2.msra.mxu0 0.0
  %860 = vmatprep.subr.mxu0 0.0
  %861 = vmatpush2.msra.mxu0 0.0
  %862 = vmatprep.subr.mxu0 0.0
  %863 = vmatpush2.msra.mxu0 0.0
  %864 = vmatprep.subr.mxu0 0.0
  %865 = vmatpush2.msra.mxu0 0.0
  %866 = vmatprep.subr.mxu0 0.0
  %867 = vmatpush2.msra.mxu0 0.0
  %868 = vmatprep.subr.mxu0 0.0
  %869 = vmatpush2.msra.mxu0 0.0
  %870 = vmatprep.subr.mxu0 0.0
  %871 = vmatpush2.msra.mxu0 0.0
  %872 = vmatprep.subr.mxu0 0.0
  %873 = vmatpush2.msra.mxu0 0.0
  %874 = vmatprep.subr.mxu0 0.0
  %875 = vmatpush2.msra.mxu0 0.0
  %876 = vmatprep.mubr.f32.mxu0 0.0
  %877 = vmatmul.mubr.f32.gmra.mxu0 %v810
  %v878 = vpop.f32.mrf.mxu0
  %v879 = vadd.f32 0.0, %v878
  %v880 = vpop.f32.mrf.mxu0
  %881 = vdwg.mxu0
  %v883 = vrot.slane %v879, 6
  %v885 = vadd.f32 %v217, %v883
  %v886 = vxor.u32 %v885, 2147483648
  %v887 = vmul.f32 %v886, 1.442695
  %v888 = vpow.pop %v887
  %v889 = vadd.f32 %v888, 1.0
  %v890 = vrcp.pop %v889
  %v891 = vmul.f32 1.0, %v890
  %v892 = vtanh.pop %v885
  %v894 = vrot.slane %v789, 6
  %v896 = vmul.f32 %v891, %v894
  %898 = vrot.lane.b32.xlu0 %v892, 64
  %v899 = vpop.permute.xlu0 %898
  %v901 = vmul.f32 %v891, %v899
  %903 = vrot.lane.b32.xlu0 %v901, 32
  %v904 = vpop.permute.xlu0 %903
  %v906 = vadd.f32 %v896, %v904
  %v907 = vtanh.pop %v906
  %909 = vrot.lane.b32.xlu0 %v907, 64
  %v910 = vpop.permute.xlu0 %909
  %v912 = vmul.f32 %v891, %v910
  %v915 = vunpack.c.l.s4 1983009808
  %v916 = vunpack.c.0.s8 %v915
  %v917 = vlaneseq
  %v918 = vshrl.u32 %v917, 7
  %v919 = vsub.s32 %v916, %v918
  %v920 = vrot.slane %v912, %v919
  %v921 = vcombine.high %v920, %v920
  %922 = vrot.lane.b32.xlu0 %v921, 64
  %v923 = vpop.permute.xlu0 %922
  %925 = vst.msk [vmem:[%s5 + $0x2] sm:$0x3] %vm452, %v923
  %v926 = vrot.slane %v912, 2
  %927 = vrot.lane.b32.xlu0 %v926, 32
  %v928 = vpop.permute.xlu0 %927
  %v929 = vsel %vm138, %v928, 0
  %931 = vmatprep.subr.mxu0 0.0
  %932 = vmatpush1.msra.mxu0 0.0
  %933 = vmatprep.subr.mxu0 0.0
  %934 = vmatpush1.msra.mxu0 0.0
  %935 = vmatprep.subr.mxu0 0.0
  %936 = vmatpush1.msra.mxu0 0.0
  %937 = vmatprep.subr.mxu0 0.0
  %938 = vmatpush1.msra.mxu0 0.0
  %939 = vmatprep.subr.mxu0 0.0
  %940 = vmatpush1.msra.mxu0 0.0
  %941 = vmatprep.subr.mxu0 0.0
  %942 = vmatpush1.msra.mxu0 0.0
  %943 = vmatprep.subr.mxu0 0.0
  %944 = vmatpush1.msra.mxu0 0.0
  %945 = vmatprep.subr.mxu0 0.0
  %946 = vmatpush1.msra.mxu0 0.0
  %947 = vmatprep.subr.mxu0 0.0
  %948 = vmatpush1.msra.mxu0 0.0
  %949 = vmatprep.subr.mxu0 0.0
  %950 = vmatpush1.msra.mxu0 0.0
  %951 = vmatprep.subr.mxu0 0.0
  %952 = vmatpush1.msra.mxu0 0.0
  %953 = vmatprep.subr.mxu0 0.0
  %954 = vmatpush1.msra.mxu0 0.0
  %955 = vmatprep.subr.mxu0 0.0
  %956 = vmatpush1.msra.mxu0 %v223
  %957 = vmatprep.subr.mxu0 0.0
  %958 = vmatpush1.msra.mxu0 %v222
  %959 = vmatprep.subr.mxu0 0.0
  %960 = vmatpush1.msra.mxu0 %v221
  %961 = vmatprep.subr.mxu0 0.0
  %962 = vmatpush1.msra.mxu0 %v220
  %963 = vmatprep.subr.mxu0 0.0
  %964 = vmatpush2.msra.mxu0 0.0
  %965 = vmatprep.subr.mxu0 0.0
  %966 = vmatpush2.msra.mxu0 0.0
  %967 = vmatprep.subr.mxu0 0.0
  %968 = vmatpush2.msra.mxu0 0.0
  %969 = vmatprep.subr.mxu0 0.0
  %970 = vmatpush2.msra.mxu0 0.0
  %971 = vmatprep.subr.mxu0 0.0
  %972 = vmatpush2.msra.mxu0 0.0
  %973 = vmatprep.subr.mxu0 0.0
  %974 = vmatpush2.msra.mxu0 0.0
  %975 = vmatprep.subr.mxu0 0.0
  %976 = vmatpush2.msra.mxu0 0.0
  %977 = vmatprep.subr.mxu0 0.0
  %978 = vmatpush2.msra.mxu0 0.0
  %979 = vmatprep.subr.mxu0 0.0
  %980 = vmatpush2.msra.mxu0 0.0
  %981 = vmatprep.subr.mxu0 0.0
  %982 = vmatpush2.msra.mxu0 0.0
  %983 = vmatprep.subr.mxu0 0.0
  %984 = vmatpush2.msra.mxu0 0.0
  %985 = vmatprep.subr.mxu0 0.0
  %986 = vmatpush2.msra.mxu0 0.0
  %987 = vmatprep.subr.mxu0 0.0
  %988 = vmatpush2.msra.mxu0 0.0
  %989 = vmatprep.subr.mxu0 0.0
  %990 = vmatpush2.msra.mxu0 0.0
  %991 = vmatprep.subr.mxu0 0.0
  %992 = vmatpush2.msra.mxu0 0.0
  %993 = vmatprep.subr.mxu0 0.0
  %994 = vmatpush2.msra.mxu0 0.0
  %995 = vmatprep.mubr.f32.mxu0 0.0
  %996 = vmatmul.mubr.f32.gmra.mxu0 %v929
  %v997 = vpop.f32.mrf.mxu0
  %v998 = vadd.f32 0.0, %v997
  %v999 = vpop.f32.mrf.mxu0
  %1000 = vdwg.mxu0
  %v1002 = vrot.slane %v998, 4
  %v1004 = vadd.f32 %v217, %v1002
  %v1005 = vxor.u32 %v1004, 2147483648
  %v1006 = vmul.f32 %v1005, 1.442695
  %v1007 = vpow.pop %v1006
  %v1008 = vadd.f32 %v1007, 1.0
  %v1009 = vrcp.pop %v1008
  %v1010 = vmul.f32 1.0, %v1009
  %v1011 = vtanh.pop %v1004
  %v1013 = vrot.slane %v906, 6
  %v1015 = vmul.f32 %v1010, %v1013
  %1017 = vrot.lane.b32.xlu0 %v1011, 64
  %v1018 = vpop.permute.xlu0 %1017
  %v1020 = vmul.f32 %v1010, %v1018
  %1022 = vrot.lane.b32.xlu0 %v1020, 32
  %v1023 = vpop.permute.xlu0 %1022
  %v1025 = vadd.f32 %v1015, %v1023
  %v1026 = vtanh.pop %v1025
  %1028 = vrot.lane.b32.xlu0 %v1026, 64
  %v1029 = vpop.permute.xlu0 %1028
  %v1031 = vmul.f32 %v1010, %v1029
  %v1033 = vcombine.high %v1031, %v1031
  %v1035 = vunpack.c.l.s4 1983009808
  %v1036 = vunpack.c.0.s8 %v1035
  %v1037 = vlaneseq
  %v1038 = vshrl.u32 %v1037, 7
  %v1039 = vsub.s32 %v1036, %v1038
  %v1040 = vrot.slane %v1033, %v1039
  %1041 = vrot.lane.b32.xlu0 %v1040, 96
  %v1042 = vpop.permute.xlu0 %1041
  %1044 = vst.msk [vmem:[%s5 + $0x2] sm:$0x3] %vm572, %v1042
  %v1045 = vrot.slane %v1031, 4
  %1046 = vrot.lane.b32.xlu0 %v1045, 32
  %v1047 = vpop.permute.xlu0 %1046
  %v1048 = vsel %vm138, %v1047, 0
  %1050 = vmatprep.subr.mxu0 0.0
  %1051 = vmatpush1.msra.mxu0 0.0
  %1052 = vmatprep.subr.mxu0 0.0
  %1053 = vmatpush1.msra.mxu0 0.0
  %1054 = vmatprep.subr.mxu0 0.0
  %1055 = vmatpush1.msra.mxu0 0.0
  %1056 = vmatprep.subr.mxu0 0.0
  %1057 = vmatpush1.msra.mxu0 0.0
  %1058 = vmatprep.subr.mxu0 0.0
  %1059 = vmatpush1.msra.mxu0 0.0
  %1060 = vmatprep.subr.mxu0 0.0
  %1061 = vmatpush1.msra.mxu0 0.0
  %1062 = vmatprep.subr.mxu0 0.0
  %1063 = vmatpush1.msra.mxu0 0.0
  %1064 = vmatprep.subr.mxu0 0.0
  %1065 = vmatpush1.msra.mxu0 0.0
  %1066 = vmatprep.subr.mxu0 0.0
  %1067 = vmatpush1.msra.mxu0 0.0
  %1068 = vmatprep.subr.mxu0 0.0
  %1069 = vmatpush1.msra.mxu0 0.0
  %1070 = vmatprep.subr.mxu0 0.0
  %1071 = vmatpush1.msra.mxu0 0.0
  %1072 = vmatprep.subr.mxu0 0.0
  %1073 = vmatpush1.msra.mxu0 0.0
  %1074 = vmatprep.subr.mxu0 0.0
  %1075 = vmatpush1.msra.mxu0 %v223
  %1076 = vmatprep.subr.mxu0 0.0
  %1077 = vmatpush1.msra.mxu0 %v222
  %1078 = vmatprep.subr.mxu0 0.0
  %1079 = vmatpush1.msra.mxu0 %v221
  %1080 = vmatprep.subr.mxu0 0.0
  %1081 = vmatpush1.msra.mxu0 %v220
  %1082 = vmatprep.subr.mxu0 0.0
  %1083 = vmatpush2.msra.mxu0 0.0
  %1084 = vmatprep.subr.mxu0 0.0
  %1085 = vmatpush2.msra.mxu0 0.0
  %1086 = vmatprep.subr.mxu0 0.0
  %1087 = vmatpush2.msra.mxu0 0.0
  %1088 = vmatprep.subr.mxu0 0.0
  %1089 = vmatpush2.msra.mxu0 0.0
  %1090 = vmatprep.subr.mxu0 0.0
  %1091 = vmatpush2.msra.mxu0 0.0
  %1092 = vmatprep.subr.mxu0 0.0
  %1093 = vmatpush2.msra.mxu0 0.0
  %1094 = vmatprep.subr.mxu0 0.0
  %1095 = vmatpush2.msra.mxu0 0.0
  %1096 = vmatprep.subr.mxu0 0.0
  %1097 = vmatpush2.msra.mxu0 0.0
  %1098 = vmatprep.subr.mxu0 0.0
  %1099 = vmatpush2.msra.mxu0 0.0
  %1100 = vmatprep.subr.mxu0 0.0
  %1101 = vmatpush2.msra.mxu0 0.0
  %1102 = vmatprep.subr.mxu0 0.0
  %1103 = vmatpush2.msra.mxu0 0.0
  %1104 = vmatprep.subr.mxu0 0.0
  %1105 = vmatpush2.msra.mxu0 0.0
  %1106 = vmatprep.subr.mxu0 0.0
  %1107 = vmatpush2.msra.mxu0 0.0
  %1108 = vmatprep.subr.mxu0 0.0
  %1109 = vmatpush2.msra.mxu0 0.0
  %1110 = vmatprep.subr.mxu0 0.0
  %1111 = vmatpush2.msra.mxu0 0.0
  %1112 = vmatprep.subr.mxu0 0.0
  %1113 = vmatpush2.msra.mxu0 0.0
  %1114 = vmatprep.mubr.f32.mxu0 0.0
  %1115 = vmatmul.mubr.f32.gmra.mxu0 %v1048
  %v1116 = vpop.f32.mrf.mxu0
  %v1117 = vadd.f32 0.0, %v1116
  %v1118 = vpop.f32.mrf.mxu0
  %1119 = vdwg.mxu0
  %v1121 = vrot.slane %v1117, 2
  %v1123 = vadd.f32 %v217, %v1121
  %v1124 = vxor.u32 %v1123, 2147483648
  %v1125 = vmul.f32 %v1124, 1.442695
  %v1126 = vpow.pop %v1125
  %v1127 = vadd.f32 %v1126, 1.0
  %v1128 = vrcp.pop %v1127
  %v1129 = vmul.f32 1.0, %v1128
  %v1130 = vtanh.pop %v1123
  %v1132 = vrot.slane %v1025, 6
  %v1134 = vmul.f32 %v1129, %v1132
  %1136 = vrot.lane.b32.xlu0 %v1130, 64
  %v1137 = vpop.permute.xlu0 %1136
  %v1139 = vmul.f32 %v1129, %v1137
  %1141 = vrot.lane.b32.xlu0 %v1139, 32
  %v1142 = vpop.permute.xlu0 %1141
  %v1144 = vadd.f32 %v1134, %v1142
  %v1145 = vtanh.pop %v1144
  %1147 = vrot.lane.b32.xlu0 %v1145, 64
  %v1148 = vpop.permute.xlu0 %1147
  %v1150 = vmul.f32 %v1129, %v1148
  %v1152 = vcombine.high %v1150, %v1150
  %v1154 = vunpack.c.l.s4 1983009808
  %v1155 = vunpack.c.0.s8 %v1154
  %v1156 = vlaneseq
  %v1157 = vshrl.u32 %v1156, 7
  %v1158 = vsub.s32 %v1155, %v1157
  %v1159 = vrot.slane %v1152, %v1158
  %v1160 = vcombine.high %v1159, %v1159
  %1162 = vst.msk [vmem:[%s5 + $0x2] sm:$0x3] %vm691, %v1160
  // Predicated region
  $region22: #{lstm_forward.1} parent=0 // pred_check
    _
  $region23: #{lstm_forward.1} parent=0 // pred_check_branch
    %1164 = sbr.rel (0) target = $region25
  $region24: #{lstm_forward.1} parent=0 // pred_region
    _
  $region25: #{lstm_forward.1} parent=0 // pred_fallthru
    _
  // Predicated region
  $region26: #{lstm_forward.1} parent=0 // pred_check
    _
  $region27: #{lstm_forward.1} parent=0 // pred_check_branch
    %1166 = sbr.rel (0) target = $region29
  $region28: #{lstm_forward.1} parent=0 // pred_region
    _
  $region29: #{lstm_forward.1} parent=0 // pred_fallthru
    _

</llo_original>
